<compile_context>
chip_gen: v5e
topology: v5e:2x2
jax: 0.10.0
libtpu: 0.0.40
codegen_flags: <defaults>
</compile_context>

<pallas_src>
import math
import numpy as np
import jax
import jax.numpy as jnp
from jax import lax
from jax.experimental import pallas as pl
from jax.experimental.pallas import tpu as pltpu

EPS = 1e-06


# ----------------------------- kernel --------------------------------------


def _make_kernel(n, v, h, bt, ef_dim, cutoff, coeff, ef_decay):
    ne = n * ef_dim
    bn = bt * n
    pi_over_cut = math.pi / cutoff

    def kernel(z_ref, pos_ref, row4_ref, off_ref, sel_ef_ref, sel_ev_ref,
               table_ref, s_ref, ea_ref, ev_ref, ef_ref):
        # ---------- node embedding: one flattened one-hot @ table on MXU -----
        # padding_idx=0 is handled by the zeroed row 0 of the table.
        z3 = z_ref[...]                                      # (Bt, N, 1) int32
        z_flat = z3.reshape(bn, 1)                           # (Bt*N, 1)
        col_v = lax.broadcasted_iota(jnp.int32, (bn, v), 1)  # (Bt*N, V)
        onehot = (col_v == z_flat).astype(jnp.float32)
        s2 = jnp.dot(onehot, table_ref[...],
                     preferred_element_type=jnp.float32)     # (Bt*N, H)
        s_ref[...] = s2.reshape(bt, n, h).astype(s_ref.dtype)

        # ---------- pairwise geometry, computed ONCE in (Bt, N, N) -----------
        p = pos_ref[...]                                     # (Bt, N, 3)
        px_c, py_c, pz_c = p[:, :, 0:1], p[:, :, 1:2], p[:, :, 2:3]
        row4 = row4_ref[...]                                 # (Bt, 4, N)
        px_r, py_r, pz_r = row4[:, 0:1, :], row4[:, 1:2, :], row4[:, 2:3, :]
        pad_r = row4[:, 3:4, :] > 0.5                        # (Bt, 1, N)
        pad_c = z3 == 0                                      # (Bt, N, 1)

        irow = lax.broadcasted_iota(jnp.int32, (n, n), 0)
        icol = lax.broadcasted_iota(jnp.int32, (n, n), 1)
        diag = irow == icol                                  # (N, N)

        dx = jnp.where(diag, 1.0, px_c - px_r)               # torch: diag = 1
        dy = jnp.where(diag, 1.0, py_c - py_r)
        dz = jnp.where(diag, 1.0, pz_c - pz_r)
        el = jnp.sqrt(dx * dx + dy * dy + dz * dz)           # (Bt, N, N)
        inv = pl.reciprocal(el + EPS, approx=False)          # 1 recip, 3 muls
        evx = jnp.where(diag, 0.0, dx * inv)
        evy = jnp.where(diag, 0.0, dy * inv)
        evz = jnp.where(diag, 0.0, dz * inv)
        el0 = jnp.where(diag, 0.0, el)

        # fused cutoff + padding mask: single select
        keep = (el0 < cutoff) & jnp.logical_not(pad_c | pad_r)
        ea = jnp.where(keep, 0.5 * (jnp.cos(el0 * pi_over_cut) + 1.0), 0.0)
        ea_ref[...] = ea.astype(ea_ref.dtype)

        # ---------- lane expansions via exact 0/1 selection matmuls (MXU) ----
        # ele[b*N+i, j*ef_dim+k] = el0[b,i,j]; eae likewise for ea.
        el2 = el0.reshape(bn, n)
        ea2 = ea.reshape(bn, n)
        sel_ef = sel_ef_ref[...]                             # (N, N*ef_dim)
        ele = jnp.dot(el2, sel_ef, preferred_element_type=jnp.float32)
        d = ele - off_ref[...]                               # (1, NE) bcast
        ef = jnp.exp(coeff * d * d)                          # ONE exp / elem
        if ef_decay:                                         # EfDecay
            eae = jnp.dot(ea2, sel_ef, preferred_element_type=jnp.float32)
            ef = ef * eae
        ef_ref[...] = ef.reshape(bt, n, ne).astype(ef_ref.dtype)

        # ev slab interleaved as [.., 3*j + c] -> free 4D reshape in wrapper.
        ev2 = (jnp.dot(evx.reshape(bn, n), sel_ev_ref[0],
                       preferred_element_type=jnp.float32)
               + jnp.dot(evy.reshape(bn, n), sel_ev_ref[1],
                         preferred_element_type=jnp.float32)
               + jnp.dot(evz.reshape(bn, n), sel_ev_ref[2],
                         preferred_element_type=jnp.float32))
        ev_ref[...] = ev2.reshape(bt, n, 3 * n).astype(ev_ref.dtype)

    return kernel


# ----------------------------- sizing / wrapper ------------------------------


def _vmem_bytes(bt, n, v, h, ef_dim):
    """Per-grid-step VMEM footprint incl. 2x double-buffering + temporaries."""
    ne = n * ef_dim
    f = 4
    io = 2 * f * (
        bt * n * (1 + 3) + bt * 4 * n                  # z, pos, row4
        + ne + n * ne + 3 * n * 3 * n + v * h          # off, sel_ef, sel_ev, table
        + bt * n * (h + n + 3 * n + ne))               # s, ea, ev, ef outputs
    tmp = f * (bt * n * v                              # one-hot
               + 10 * bt * n * n                       # dx..el0/ea/masks
               + 3 * bt * n * ne)                      # ele, d/ef, eae
    return io + tmp


def _choose_batch_block(b, n, v, h, ef_dim, budget_bytes=40 << 20, cap=64):
    """Largest divisor of B that fits the VMEM budget; prefer >=2 (even) grid
    steps so v7x megacore can shard the parallel batch axis."""
    divs = [d for d in range(1, min(b, cap) + 1) if b % d == 0]
    fits = [d for d in divs if _vmem_bytes(d, n, v, h, ef_dim) <= budget_bytes]
    if not fits:
        fits = [1]
    multi = [d for d in fits if b // d >= 2]
    pool = multi if multi else fits
    even = [d for d in pool if (b // d) % 2 == 0]
    pool = even if even else pool
    return max(pool)


def mol2graph(z, pos, emb_table, *, cutoff: float, ef_dim: int,
              ef_decay: bool = True, block_b: int | None = None,
              out_dtype=jnp.float32):
    """Pallas implementation of Mol2Graph.forward. Returns (s, ea, ev, ef)."""
    z = z.astype(jnp.int32)
    pos = pos.astype(jnp.float32)
    emb_table = emb_table.astype(jnp.float32)
    B, N = z.shape
    V, H = emb_table.shape
    NE = N * ef_dim

    # Gaussian-smearing RBF constants (guard ef_dim == 1).
    delta = cutoff / max(ef_dim - 1, 1)
    coeff = -0.5 / (delta * delta)
    off = jnp.asarray(
        np.tile(np.linspace(0.0, cutoff, ef_dim, dtype=np.float32), N)
    ).reshape(1, NE)

    # Exact 0/1 lane-expansion (selection) matrices, kept resident.
    sel_ef = jnp.asarray(np.repeat(np.eye(N, dtype=np.float32), ef_dim, axis=1))
    sel_ev_np = np.zeros((3, N, 3 * N), dtype=np.float32)
    jj = np.arange(N)
    for c in range(3):
        sel_ev_np[c, jj, 3 * jj + c] = 1.0
    sel_ev = jnp.asarray(sel_ev_np)

    # Row-oriented (lane) views of pos plus a padded-atom flag channel.
    pos_t = jnp.transpose(pos, (0, 2, 1))                    # (B, 3, N)
    pad_row = (z == 0).astype(jnp.float32)[:, None, :]       # (B, 1, N)
    row4 = jnp.concatenate([pos_t, pad_row], axis=1)         # (B, 4, N)
    z_col = z.reshape(B, N, 1)

    bt = block_b if block_b is not None else _choose_batch_block(B, N, V, H, ef_dim)
    assert B % bt == 0
    grid = (B // bt,)
    vmem_limit = int(max(32 << 20,
                         min(_vmem_bytes(bt, N, V, H, ef_dim) + (4 << 20),
                             48 << 20)))
    # TODO(synk): for very large molecules (N >= ~512) add an (i, j) tiling of
    # the N x N plane so the double-buffered ef block fits v7x's 64 MiB VMEM;
    # full-plane blocks are used here.

    kernel = _make_kernel(N, V, H, bt, ef_dim, float(cutoff), float(coeff),
                          bool(ef_decay))

    out_shapes = (
        jax.ShapeDtypeStruct((B, N, H), out_dtype),          # s
        jax.ShapeDtypeStruct((B, N, N), out_dtype),          # ea
        jax.ShapeDtypeStruct((B, N, 3 * N), out_dtype),      # ev slab (lane-dense)
        jax.ShapeDtypeStruct((B, N, NE), out_dtype),         # ef slab (lane-dense)
    )
    s, ea, ev_slab, ef_slab = pl.pallas_call(
        kernel,
        out_shape=out_shapes,
        grid=grid,
        in_specs=[
            pl.BlockSpec((bt, N, 1), lambda g: (g, 0, 0)),   # z (column)
            pl.BlockSpec((bt, N, 3), lambda g: (g, 0, 0)),   # pos (column)
            pl.BlockSpec((bt, 4, N), lambda g: (g, 0, 0)),   # pos rows + pad
            pl.BlockSpec((1, NE), lambda g: (0, 0)),         # RBF offsets
            pl.BlockSpec((N, NE), lambda g: (0, 0)),         # ef selection
            pl.BlockSpec((3, N, 3 * N), lambda g: (0, 0, 0)),# ev selections
            pl.BlockSpec((V, H), lambda g: (0, 0)),          # emb table
        ],
        out_specs=[
            pl.BlockSpec((bt, N, H), lambda g: (g, 0, 0)),
            pl.BlockSpec((bt, N, N), lambda g: (g, 0, 0)),
            pl.BlockSpec((bt, N, 3 * N), lambda g: (g, 0, 0)),
            pl.BlockSpec((bt, N, NE), lambda g: (g, 0, 0)),
        ],
        compiler_params=pltpu.CompilerParams(
            dimension_semantics=("parallel",),
            vmem_limit_bytes=vmem_limit),
    )(z_col, pos, row4, off, sel_ef, sel_ev, emb_table)

    ev = ev_slab.reshape(B, N, N, 3)                         # free reshape
    ef = ef_slab.reshape(B, N, N, ef_dim)                    # free reshape
    return s, ea, ev, ef


# ----------------------------- reference ------------------------------------


def _reference(z, pos, emb_table, *, cutoff, ef_dim, ef_decay):
    B, N = z.shape
    s = emb_table[z]
    ev = pos[:, :, None, :] - pos[:, None, :, :]
    idx = jnp.arange(N)
    ev = ev.at[:, idx, idx].set(1.0)
    el = jnp.sqrt(jnp.sum(ev * ev, axis=-1))
    ev = ev / (el[..., None] + EPS)
    el = el.at[:, idx, idx].set(0.0)
    ev = ev.at[:, idx, idx].set(0.0)
    offsets = jnp.linspace(0.0, cutoff, ef_dim, dtype=jnp.float32)
    delta = cutoff / max(ef_dim - 1, 1)
    coeff = -0.5 / (delta * delta)
    ef = jnp.exp(coeff * (el[..., None] - offsets) ** 2)
    ea = 0.5 * (jnp.cos(el * jnp.pi / cutoff) + 1.0) * (el < cutoff)
    zmask = (z == 0)
    mask = zmask[:, :, None] | zmask[:, None, :]
    ea = jnp.where(mask, 0.0, ea)
    if ef_decay:
        ef = ea[..., None] * ef
    return s, ea, ev, ef


# ----------------------------- main ------------------------------------------


if __name__ == "__main__":
    B, N = 2, 8
    hid_dim, ef_dim = 32, 16
    max_z, cutoff = 10, 5.0
    ef_decay = True  # exercise EfDecay branch

    key = jax.random.PRNGKey(0)
    kz, kp, ke = jax.random.split(key, 3)
    z = jax.random.randint(kz, (B, N), 0, max_z + 1, dtype=jnp.int32)
    z = z.at[0, -1].set(0)  # ensure at least one padded atom to exercise mask
    pos = jax.random.normal(kp, (B, N, 3), dtype=jnp.float32) * 2.0
    emb_table = jax.random.normal(ke, (max_z + 1, hid_dim), dtype=jnp.float32)
    emb_table = emb_table.at[0].set(0.0)  # padding_idx=0

    s, ea, ev, ef = jax.block_until_ready(
        mol2graph(z, pos, emb_table, cutoff=cutoff, ef_dim=ef_dim,
                  ef_decay=ef_decay))

    s_r, ea_r, ev_r, ef_r = _reference(
        z, pos, emb_table, cutoff=cutoff, ef_dim=ef_dim, ef_decay=ef_decay)

    np.testing.assert_allclose(np.asarray(s), np.asarray(s_r), rtol=1e-5, atol=1e-5)
    np.testing.assert_allclose(np.asarray(ea), np.asarray(ea_r), rtol=1e-5, atol=1e-5)
    np.testing.assert_allclose(np.asarray(ev), np.asarray(ev_r), rtol=1e-5, atol=1e-5)
    np.testing.assert_allclose(np.asarray(ef), np.asarray(ef_r), rtol=1e-5, atol=1e-5)

    # TODO(synk): ln_emb=True (LayerNorm on node embeddings) not implemented;
    # module default is Identity.  Only the Gaussian-smearing rbf variant is
    # implemented (other entries of rbf_class_mapping are not).
    print("KERNEL_OK")
</pallas_src>

<mosaic_0001>
module attributes {stable_mosaic.version = 11 : i64} {
  func.func @kernel(%arg0: i32, %arg1: memref<1x8x1xi32, #tpu.memory_space<vmem>>, %arg2: memref<1x8x3xf32, #tpu.memory_space<vmem>>, %arg3: memref<1x4x8xf32, #tpu.memory_space<vmem>>, %arg4: memref<1x128xf32, #tpu.memory_space<vmem>>, %arg5: memref<8x128xf32, #tpu.memory_space<vmem>>, %arg6: memref<3x8x24xf32, #tpu.memory_space<vmem>>, %arg7: memref<11x32xf32, #tpu.memory_space<vmem>>, %arg8: memref<1x8x32xf32, #tpu.memory_space<vmem>>, %arg9: memref<1x8x8xf32, #tpu.memory_space<vmem>>, %arg10: memref<1x8x24xf32, #tpu.memory_space<vmem>>, %arg11: memref<1x8x128xf32, #tpu.memory_space<vmem>>) attributes {dimension_semantics = [#tpu.dimension_semantics<parallel>], iteration_bounds = array<i64: 2>, scalar_prefetch = 0 : i64, scratch_operands = 0 : i64, tpu.core_type = #tpu.core_type<tc>, window_params = [{transform_indices = @transform_0, window_bounds = array<i64: 1, 8, 1>}, {transform_indices = @transform_1, window_bounds = array<i64: 1, 8, 3>}, {transform_indices = @transform_2, window_bounds = array<i64: 1, 4, 8>}, {pipeline_mode = #tpu.pipeline_mode<synchronous>, transform_indices = @transform_3, window_bounds = array<i64: 1, 128>}, {pipeline_mode = #tpu.pipeline_mode<synchronous>, transform_indices = @transform_4, window_bounds = array<i64: 8, 128>}, {pipeline_mode = #tpu.pipeline_mode<synchronous>, transform_indices = @transform_5, window_bounds = array<i64: 3, 8, 24>}, {pipeline_mode = #tpu.pipeline_mode<synchronous>, transform_indices = @transform_6, window_bounds = array<i64: 11, 32>}, {transform_indices = @transform_7, window_bounds = array<i64: 1, 8, 32>}, {transform_indices = @transform_8, window_bounds = array<i64: 1, 8, 8>}, {transform_indices = @transform_9, window_bounds = array<i64: 1, 8, 24>}, {transform_indices = @transform_10, window_bounds = array<i64: 1, 8, 128>}]} {
    %c0 = arith.constant 0 : index
    %c0_0 = arith.constant 0 : index
    %c0_1 = arith.constant 0 : index
    %0 = vector.load %arg1[%c0, %c0_0, %c0_1] : memref<1x8x1xi32, #tpu.memory_space<vmem>>, vector<1x8x1xi32>
    %1 = vector.shape_cast %0 : vector<1x8x1xi32> to vector<8x1xi32>
    %2 = tpu.iota {dimensions = array<i32: 1>} : vector<8x11xi32>
    %3 = vector.broadcast %1 : vector<8x1xi32> to vector<8x11xi32>
    %4 = arith.cmpi eq, %2, %3 : vector<8x11xi32>
    %5 = arith.extui %4 : vector<8x11xi1> to vector<8x11xi32>
    %6 = arith.sitofp %5 : vector<8x11xi32> to vector<8x11xf32>
    %c0_2 = arith.constant 0 : index
    %c0_3 = arith.constant 0 : index
    %7 = vector.load %arg7[%c0_2, %c0_3] : memref<11x32xf32, #tpu.memory_space<vmem>>, vector<11x32xf32>
    %cst = arith.constant dense<0.000000e+00> : vector<8x32xf32>
    %8 = tpu.matmul %6, %7, %cst {dimension_numbers = #tpu.dot_dimension_numbers<[1], [0], [0], [1], [0, 0, 1, 1], [], []>} : vector<8x11xf32>, vector<11x32xf32>, vector<8x32xf32> -> vector<8x32xf32>
    %9 = vector.shape_cast %8 : vector<8x32xf32> to vector<1x8x32xf32>
    %c0_4 = arith.constant 0 : index
    %c0_5 = arith.constant 0 : index
    %c0_6 = arith.constant 0 : index
    %10 = vector.load %arg8[%c0_4, %c0_5, %c0_6] : memref<1x8x32xf32, #tpu.memory_space<vmem>>, vector<1x8x32xf32>
    tpu.vector_store %arg8[%c0_4, %c0_5, %c0_6], %9 {strides = array<i32>} : memref<1x8x32xf32, #tpu.memory_space<vmem>>, vector<1x8x32xf32>,
    %c0_7 = arith.constant 0 : index
    %c0_8 = arith.constant 0 : index
    %c0_9 = arith.constant 0 : index
    %11 = vector.load %arg2[%c0_7, %c0_8, %c0_9] : memref<1x8x3xf32, #tpu.memory_space<vmem>>, vector<1x8x3xf32>
    %12 = vector.extract_strided_slice %11 {offsets = [0, 0, 0], sizes = [1, 8, 1], strides = [1, 1, 1]} : vector<1x8x3xf32> to vector<1x8x1xf32>
    %13 = vector.extract_strided_slice %11 {offsets = [0, 0, 1], sizes = [1, 8, 1], strides = [1, 1, 1]} : vector<1x8x3xf32> to vector<1x8x1xf32>
    %14 = vector.extract_strided_slice %11 {offsets = [0, 0, 2], sizes = [1, 8, 1], strides = [1, 1, 1]} : vector<1x8x3xf32> to vector<1x8x1xf32>
    %c0_10 = arith.constant 0 : index
    %c0_11 = arith.constant 0 : index
    %c0_12 = arith.constant 0 : index
    %15 = vector.load %arg3[%c0_10, %c0_11, %c0_12] : memref<1x4x8xf32, #tpu.memory_space<vmem>>, vector<1x4x8xf32>
    %16 = vector.extract_strided_slice %15 {offsets = [0, 0, 0], sizes = [1, 1, 8], strides = [1, 1, 1]} : vector<1x4x8xf32> to vector<1x1x8xf32>
    %17 = vector.extract_strided_slice %15 {offsets = [0, 1, 0], sizes = [1, 1, 8], strides = [1, 1, 1]} : vector<1x4x8xf32> to vector<1x1x8xf32>
    %18 = vector.extract_strided_slice %15 {offsets = [0, 2, 0], sizes = [1, 1, 8], strides = [1, 1, 1]} : vector<1x4x8xf32> to vector<1x1x8xf32>
    %19 = vector.extract_strided_slice %15 {offsets = [0, 3, 0], sizes = [1, 1, 8], strides = [1, 1, 1]} : vector<1x4x8xf32> to vector<1x1x8xf32>
    %cst_13 = arith.constant 5.000000e-01 : f32
    %20 = vector.broadcast %cst_13 : f32 to vector<1x1x8xf32>
    %21 = arith.cmpf ogt, %19, %20 : vector<1x1x8xf32>
    %c0_i32 = arith.constant 0 : i32
    %22 = vector.broadcast %c0_i32 : i32 to vector<1x8x1xi32>
    %23 = arith.cmpi eq, %0, %22 : vector<1x8x1xi32>
    %24 = tpu.iota {dimensions = array<i32: 0>} : vector<8x8xi32>
    %25 = tpu.iota {dimensions = array<i32: 1>} : vector<8x8xi32>
    %26 = arith.cmpi eq, %24, %25 : vector<8x8xi32>
    %27 = vector.broadcast %12 : vector<1x8x1xf32> to vector<1x8x8xf32>
    %28 = vector.broadcast %16 : vector<1x1x8xf32> to vector<1x8x8xf32>
    %29 = arith.subf %27, %28 : vector<1x8x8xf32>
    %cst_14 = arith.constant 1.000000e+00 : f32
    %30 = vector.shape_cast %26 : vector<8x8xi1> to vector<1x8x8xi1>
    %31 = vector.broadcast %cst_14 : f32 to vector<1x8x8xf32>
    %32 = arith.select %30, %31, %29 : vector<1x8x8xi1>, vector<1x8x8xf32>
    %33 = vector.broadcast %13 : vector<1x8x1xf32> to vector<1x8x8xf32>
    %34 = vector.broadcast %17 : vector<1x1x8xf32> to vector<1x8x8xf32>
    %35 = arith.subf %33, %34 : vector<1x8x8xf32>
    %cst_15 = arith.constant 1.000000e+00 : f32
    %36 = vector.shape_cast %26 : vector<8x8xi1> to vector<1x8x8xi1>
    %37 = vector.broadcast %cst_15 : f32 to vector<1x8x8xf32>
    %38 = arith.select %36, %37, %35 : vector<1x8x8xi1>, vector<1x8x8xf32>
    %39 = vector.broadcast %14 : vector<1x8x1xf32> to vector<1x8x8xf32>
    %40 = vector.broadcast %18 : vector<1x1x8xf32> to vector<1x8x8xf32>
    %41 = arith.subf %39, %40 : vector<1x8x8xf32>
    %cst_16 = arith.constant 1.000000e+00 : f32
    %42 = vector.shape_cast %26 : vector<8x8xi1> to vector<1x8x8xi1>
    %43 = vector.broadcast %cst_16 : f32 to vector<1x8x8xf32>
    %44 = arith.select %42, %43, %41 : vector<1x8x8xi1>, vector<1x8x8xf32>
    %45 = arith.mulf %32, %32 : vector<1x8x8xf32>
    %46 = arith.mulf %38, %38 : vector<1x8x8xf32>
    %47 = arith.addf %45, %46 : vector<1x8x8xf32>
    %48 = arith.mulf %44, %44 : vector<1x8x8xf32>
    %49 = arith.addf %47, %48 : vector<1x8x8xf32>
    %50 = math.sqrt %49 : vector<1x8x8xf32>
    %cst_17 = arith.constant 9.99999997E-7 : f32
    %51 = vector.broadcast %cst_17 : f32 to vector<1x8x8xf32>
    %52 = arith.addf %50, %51 : vector<1x8x8xf32>
    %53 = tpu.reciprocal %52 : vector<1x8x8xf32> -> vector<1x8x8xf32>
    %54 = arith.mulf %32, %53 : vector<1x8x8xf32>
    %cst_18 = arith.constant 0.000000e+00 : f32
    %55 = vector.shape_cast %26 : vector<8x8xi1> to vector<1x8x8xi1>
    %56 = vector.broadcast %cst_18 : f32 to vector<1x8x8xf32>
    %57 = arith.select %55, %56, %54 : vector<1x8x8xi1>, vector<1x8x8xf32>
    %58 = arith.mulf %38, %53 : vector<1x8x8xf32>
    %cst_19 = arith.constant 0.000000e+00 : f32
    %59 = vector.shape_cast %26 : vector<8x8xi1> to vector<1x8x8xi1>
    %60 = vector.broadcast %cst_19 : f32 to vector<1x8x8xf32>
    %61 = arith.select %59, %60, %58 : vector<1x8x8xi1>, vector<1x8x8xf32>
    %62 = arith.mulf %44, %53 : vector<1x8x8xf32>
    %cst_20 = arith.constant 0.000000e+00 : f32
    %63 = vector.shape_cast %26 : vector<8x8xi1> to vector<1x8x8xi1>
    %64 = vector.broadcast %cst_20 : f32 to vector<1x8x8xf32>
    %65 = arith.select %63, %64, %62 : vector<1x8x8xi1>, vector<1x8x8xf32>
    %cst_21 = arith.constant 0.000000e+00 : f32
    %66 = vector.shape_cast %26 : vector<8x8xi1> to vector<1x8x8xi1>
    %67 = vector.broadcast %cst_21 : f32 to vector<1x8x8xf32>
    %68 = arith.select %66, %67, %50 : vector<1x8x8xi1>, vector<1x8x8xf32>
    %cst_22 = arith.constant 5.000000e+00 : f32
    %69 = vector.broadcast %cst_22 : f32 to vector<1x8x8xf32>
    %70 = arith.cmpf olt, %68, %69 : vector<1x8x8xf32>
    %71 = vector.broadcast %23 : vector<1x8x1xi1> to vector<1x8x8xi1>
    %72 = vector.broadcast %21 : vector<1x1x8xi1> to vector<1x8x8xi1>
    %73 = arith.ori %71, %72 : vector<1x8x8xi1>
    %cst_23 = arith.constant dense<true> : vector<1x8x8xi1>
    %74 = arith.xori %73, %cst_23 : vector<1x8x8xi1>
    %75 = arith.andi %70, %74 : vector<1x8x8xi1>
    %cst_24 = arith.constant 0.628318548 : f32
    %76 = vector.broadcast %cst_24 : f32 to vector<1x8x8xf32>
    %77 = arith.mulf %68, %76 : vector<1x8x8xf32>
    %78 = math.cos %77 : vector<1x8x8xf32>
    %cst_25 = arith.constant 1.000000e+00 : f32
    %79 = vector.broadcast %cst_25 : f32 to vector<1x8x8xf32>
    %80 = arith.addf %78, %79 : vector<1x8x8xf32>
    %cst_26 = arith.constant 5.000000e-01 : f32
    %81 = vector.broadcast %cst_26 : f32 to vector<1x8x8xf32>
    %82 = arith.mulf %81, %80 : vector<1x8x8xf32>
    %cst_27 = arith.constant 0.000000e+00 : f32
    %83 = vector.broadcast %cst_27 : f32 to vector<1x8x8xf32>
    %84 = arith.select %75, %82, %83 : vector<1x8x8xi1>, vector<1x8x8xf32>
    %c0_28 = arith.constant 0 : index
    %c0_29 = arith.constant 0 : index
    %c0_30 = arith.constant 0 : index
    %85 = vector.load %arg9[%c0_28, %c0_29, %c0_30] : memref<1x8x8xf32, #tpu.memory_space<vmem>>, vector<1x8x8xf32>
    tpu.vector_store %arg9[%c0_28, %c0_29, %c0_30], %84 {strides = array<i32>} : memref<1x8x8xf32, #tpu.memory_space<vmem>>, vector<1x8x8xf32>,
    %86 = vector.shape_cast %68 : vector<1x8x8xf32> to vector<8x8xf32>
    %87 = vector.shape_cast %84 : vector<1x8x8xf32> to vector<8x8xf32>
    %c0_31 = arith.constant 0 : index
    %c0_32 = arith.constant 0 : index
    %88 = vector.load %arg5[%c0_31, %c0_32] : memref<8x128xf32, #tpu.memory_space<vmem>>, vector<8x128xf32>
    %cst_33 = arith.constant dense<0.000000e+00> : vector<8x128xf32>
    %89 = tpu.matmul %86, %88, %cst_33 {dimension_numbers = #tpu.dot_dimension_numbers<[1], [0], [0], [1], [0, 0, 1, 1], [], []>} : vector<8x8xf32>, vector<8x128xf32>, vector<8x128xf32> -> vector<8x128xf32>
    %c0_34 = arith.constant 0 : index
    %c0_35 = arith.constant 0 : index
    %90 = vector.load %arg4[%c0_34, %c0_35] : memref<1x128xf32, #tpu.memory_space<vmem>>, vector<1x128xf32>
    %91 = vector.broadcast %90 : vector<1x128xf32> to vector<8x128xf32>
    %92 = arith.subf %89, %91 : vector<8x128xf32>
    %cst_36 = arith.constant -4.500000e+00 : f32
    %93 = vector.broadcast %cst_36 : f32 to vector<8x128xf32>
    %94 = arith.mulf %93, %92 : vector<8x128xf32>
    %95 = arith.mulf %94, %92 : vector<8x128xf32>
    %96 = math.exp %95 : vector<8x128xf32>
    %cst_37 = arith.constant dense<0.000000e+00> : vector<8x128xf32>
    %97 = tpu.matmul %87, %88, %cst_37 {dimension_numbers = #tpu.dot_dimension_numbers<[1], [0], [0], [1], [0, 0, 1, 1], [], []>} : vector<8x8xf32>, vector<8x128xf32>, vector<8x128xf32> -> vector<8x128xf32>
    %98 = arith.mulf %96, %97 : vector<8x128xf32>
    %99 = vector.shape_cast %98 : vector<8x128xf32> to vector<1x8x128xf32>
    %c0_38 = arith.constant 0 : index
    %c0_39 = arith.constant 0 : index
    %c0_40 = arith.constant 0 : index
    %100 = vector.load %arg11[%c0_38, %c0_39, %c0_40] : memref<1x8x128xf32, #tpu.memory_space<vmem>>, vector<1x8x128xf32>
    tpu.vector_store %arg11[%c0_38, %c0_39, %c0_40], %99 {strides = array<i32>} : memref<1x8x128xf32, #tpu.memory_space<vmem>>, vector<1x8x128xf32>,
    %101 = vector.shape_cast %57 : vector<1x8x8xf32> to vector<8x8xf32>
    %c0_41 = arith.constant 0 : index
    %c0_42 = arith.constant 0 : index
    %c0_43 = arith.constant 0 : index
    %102 = vector.load %arg6[%c0_41, %c0_42, %c0_43] : memref<3x8x24xf32, #tpu.memory_space<vmem>>, vector<1x8x24xf32>
    %103 = vector.shape_cast %102 : vector<1x8x24xf32> to vector<8x24xf32>
    %cst_44 = arith.constant dense<0.000000e+00> : vector<8x24xf32>
    %104 = tpu.matmul %101, %103, %cst_44 {dimension_numbers = #tpu.dot_dimension_numbers<[1], [0], [0], [1], [0, 0, 1, 1], [], []>} : vector<8x8xf32>, vector<8x24xf32>, vector<8x24xf32> -> vector<8x24xf32>
    %105 = vector.shape_cast %61 : vector<1x8x8xf32> to vector<8x8xf32>
    %c1 = arith.constant 1 : index
    %c0_45 = arith.constant 0 : index
    %c0_46 = arith.constant 0 : index
    %106 = vector.load %arg6[%c1, %c0_45, %c0_46] : memref<3x8x24xf32, #tpu.memory_space<vmem>>, vector<1x8x24xf32>
    %107 = vector.shape_cast %106 : vector<1x8x24xf32> to vector<8x24xf32>
    %cst_47 = arith.constant dense<0.000000e+00> : vector<8x24xf32>
    %108 = tpu.matmul %105, %107, %cst_47 {dimension_numbers = #tpu.dot_dimension_numbers<[1], [0], [0], [1], [0, 0, 1, 1], [], []>} : vector<8x8xf32>, vector<8x24xf32>, vector<8x24xf32> -> vector<8x24xf32>
    %109 = arith.addf %104, %108 : vector<8x24xf32>
    %110 = vector.shape_cast %65 : vector<1x8x8xf32> to vector<8x8xf32>
    %c2 = arith.constant 2 : index
    %c0_48 = arith.constant 0 : index
    %c0_49 = arith.constant 0 : index
    %111 = vector.load %arg6[%c2, %c0_48, %c0_49] : memref<3x8x24xf32, #tpu.memory_space<vmem>>, vector<1x8x24xf32>
    %112 = vector.shape_cast %111 : vector<1x8x24xf32> to vector<8x24xf32>
    %cst_50 = arith.constant dense<0.000000e+00> : vector<8x24xf32>
    %113 = tpu.matmul %110, %112, %cst_50 {dimension_numbers = #tpu.dot_dimension_numbers<[1], [0], [0], [1], [0, 0, 1, 1], [], []>} : vector<8x8xf32>, vector<8x24xf32>, vector<8x24xf32> -> vector<8x24xf32>
    %114 = arith.addf %109, %113 : vector<8x24xf32>
    %115 = vector.shape_cast %114 : vector<8x24xf32> to vector<1x8x24xf32>
    %c0_51 = arith.constant 0 : index
    %c0_52 = arith.constant 0 : index
    %c0_53 = arith.constant 0 : index
    %116 = vector.load %arg10[%c0_51, %c0_52, %c0_53] : memref<1x8x24xf32, #tpu.memory_space<vmem>>, vector<1x8x24xf32>
    tpu.vector_store %arg10[%c0_51, %c0_52, %c0_53], %115 {strides = array<i32>} : memref<1x8x24xf32, #tpu.memory_space<vmem>>, vector<1x8x24xf32>,
    return
  }
  func.func @transform_0(%arg0: i32) -> (i32, i32, i32) {
    %c0_i32 = arith.constant 0 : i32
    %c0_i32_0 = arith.constant 0 : i32
    %c0_i32_1 = arith.constant 0 : i32
    return %arg0, %c0_i32, %c0_i32_0 : i32, i32, i32
  }
  func.func @transform_1(%arg0: i32) -> (i32, i32, i32) {
    %c0_i32 = arith.constant 0 : i32
    %c0_i32_0 = arith.constant 0 : i32
    %c0_i32_1 = arith.constant 0 : i32
    return %arg0, %c0_i32, %c0_i32_0 : i32, i32, i32
  }
  func.func @transform_2(%arg0: i32) -> (i32, i32, i32) {
    %c0_i32 = arith.constant 0 : i32
    %c0_i32_0 = arith.constant 0 : i32
    %c0_i32_1 = arith.constant 0 : i32
    return %arg0, %c0_i32, %c0_i32_0 : i32, i32, i32
  }
  func.func @transform_3(%arg0: i32) -> (i32, i32) {
    %c0_i32 = arith.constant 0 : i32
    %c0_i32_0 = arith.constant 0 : i32
    %c0_i32_1 = arith.constant 0 : i32
    return %c0_i32, %c0_i32_0 : i32, i32
  }
  func.func @transform_4(%arg0: i32) -> (i32, i32) {
    %c0_i32 = arith.constant 0 : i32
    %c0_i32_0 = arith.constant 0 : i32
    %c0_i32_1 = arith.constant 0 : i32
    return %c0_i32, %c0_i32_0 : i32, i32
  }
  func.func @transform_5(%arg0: i32) -> (i32, i32, i32) {
    %c0_i32 = arith.constant 0 : i32
    %c0_i32_0 = arith.constant 0 : i32
    %c0_i32_1 = arith.constant 0 : i32
    %c0_i32_2 = arith.constant 0 : i32
    return %c0_i32, %c0_i32_0, %c0_i32_1 : i32, i32, i32
  }
  func.func @transform_6(%arg0: i32) -> (i32, i32) {
    %c0_i32 = arith.constant 0 : i32
    %c0_i32_0 = arith.constant 0 : i32
    %c0_i32_1 = arith.constant 0 : i32
    return %c0_i32, %c0_i32_0 : i32, i32
  }
  func.func @transform_7(%arg0: i32) -> (i32, i32, i32) {
    %c0_i32 = arith.constant 0 : i32
    %c0_i32_0 = arith.constant 0 : i32
    %c0_i32_1 = arith.constant 0 : i32
    return %arg0, %c0_i32, %c0_i32_0 : i32, i32, i32
  }
  func.func @transform_8(%arg0: i32) -> (i32, i32, i32) {
    %c0_i32 = arith.constant 0 : i32
    %c0_i32_0 = arith.constant 0 : i32
    %c0_i32_1 = arith.constant 0 : i32
    return %arg0, %c0_i32, %c0_i32_0 : i32, i32, i32
  }
  func.func @transform_9(%arg0: i32) -> (i32, i32, i32) {
    %c0_i32 = arith.constant 0 : i32
    %c0_i32_0 = arith.constant 0 : i32
    %c0_i32_1 = arith.constant 0 : i32
    return %arg0, %c0_i32, %c0_i32_0 : i32, i32, i32
  }
  func.func @transform_10(%arg0: i32) -> (i32, i32, i32) {
    %c0_i32 = arith.constant 0 : i32
    %c0_i32_0 = arith.constant 0 : i32
    %c0_i32_1 = arith.constant 0 : i32
    return %arg0, %c0_i32, %c0_i32_0 : i32, i32, i32
  }
}

</mosaic_0001>

<llo_original>
// kernel: tpu_custom_call.1
$region0: #{tpu_custom_call.1}
  #allocation0 [shape = 'u32[]', space=smem, size = 0x4, offset = 0x4, fixed_abs, tag = 'smem constant byte address 0x4 - core index']
  #allocation1 [shape = 'u32[72,128]{1,0:T(1,128)}', space=vmem, size = 0x9000, scoped, tag = 'internal scratch']
  %s0 = inlined_call_operand.vmem [shape: s32[2,8,1], index: 0, kind: input, shape index: {}]
  %s1 = inlined_call_operand.vmem [shape: f32[2,8,3], index: 1, kind: input, shape index: {}]
  %s2 = inlined_call_operand.vmem [shape: f32[2,4,8], index: 2, kind: input, shape index: {}]
  %s3 = inlined_call_operand.vmem [shape: f32[1,128], index: 3, kind: input, shape index: {}]
  %s4 = inlined_call_operand.hbm [shape: f32[8,128], index: 4, kind: input, shape index: {}]
  %s5 = inlined_call_operand.vmem [shape: f32[3,8,24], index: 5, kind: input, shape index: {}]
  %s6 = inlined_call_operand.hbm [shape: f32[11,32], index: 6, kind: input, shape index: {}]
  %s7 = inlined_call_operand.hbm [shape: f32[2,8,32], index: 7, kind: output, shape index: {0}]
  %s8 = inlined_call_operand.hbm [shape: f32[2,8,8], index: 8, kind: output, shape index: {1}]
  %s9 = inlined_call_operand.hbm [shape: f32[2,8,24], index: 9, kind: output, shape index: {2}]
  %s10 = inlined_call_operand.hbm [shape: f32[2,8,128], index: 10, kind: output, shape index: {3}]
  %11 = xla_tuple %s7, %s8, %s9, %s10
  %s12 = sld [smem:[#allocation0]]
  $region93: #{tpu_custom_call.1} parent=0
    _
  %s14 = ssub.s32 1, %s12
  %s15 = scalar_select 0, %s14, %s12
  $region1: #{tpu_custom_call.1} parent=0
    #allocation2 [shape = 'u8[4096]{0}', space=vmem, size = 0x1000, scoped, tag = 'input window, operand 4, single buffered']
    #allocation3 [shape = 's32[2]{0}', space=sflag, size = 0x8, scoped, tag = 'scoped memory for tpu_custom_call.1']
    #allocation4 [shape = 's32[2]{0}', space=sflag, size = 0x8, scoped, tag = 'scoped memory for tpu_custom_call.1']
    #allocation5 [shape = 'u8[8192]{0}', space=vmem, size = 0x2000, scoped, tag = 'input window, operand 6, single buffered']
    #allocation6 [shape = 's32[1]{0}', space=sflag, size = 0x4, scoped, tag = 'scoped memory for tpu_custom_call.1']
    #allocation7 [shape = 'u8[8192]{0}', space=vmem, size = 0x2000, scoped, tag = 'output window, operand 0']
    #allocation8 [shape = 'u8[8192]{0}', space=vmem, size = 0x2000, scoped, tag = 'output window, operand 1']
    #allocation9 [shape = 's32[2]{0}', space=sflag, size = 0x8, scoped, tag = 'scoped memory for tpu_custom_call.1']
    #allocation10 [shape = 'u8[8192]{0}', space=vmem, size = 0x2000, scoped, tag = 'output window, operand 2']
    #allocation11 [shape = 'u8[8192]{0}', space=vmem, size = 0x2000, scoped, tag = 'output window, operand 3']
    #allocation12 [shape = 's32[2]{0}', space=sflag, size = 0x8, scoped, tag = 'scoped memory for tpu_custom_call.1']
    %16 = vsyncpa [#allocation3], 0
    %17 = vsyncpa [#allocation6], 0
    %18 = vsyncpa [#allocation4], 0
    %s19 = scalar_lea.sflag [#allocation4], 1
    %20 = vsyncpa %s19, 0
    %21 = vsyncpa [#allocation9], 0
    %s22 = scalar_lea.sflag [#allocation9], 1
    %23 = vsyncpa %s22, 0
    %24 = vsyncpa [#allocation12], 0
    %s25 = scalar_lea.sflag [#allocation12], 1
    %26 = vsyncpa %s25, 0
    loop: start=0, step=1, limit=4
    $region2: #{tpu_custom_call.1} parent=1 // loop_pre_header
      _
    $region3: #{tpu_custom_call.1} parent=1 // loop_header
      %s28 = sphi 0, %s32
      %p29 = scmp.ge.s32.totalorder %s28, 4
      %s38 = sphi 0, %s40
      %s41 = sphi 0, %s38
      %s42 = sphi 0, %s41
      %s58 = sphi 0, %s42
      %s64 = sphi 0, %s66
      %s67 = sphi 0, %s64
      %s68 = sphi 0, %s67
      %s84 = sphi 0, %s68
      %s90 = sphi 0, %s92
      %s93 = sphi 0, %s90
      %s94 = sphi 0, %s93
      %s110 = sphi 0, %s94
      %s114 = sphi 0, %s114
      %s116 = sphi 0, %s114
      %s117 = sphi 0, %s116
      %s131 = sphi 0, %s117
      %s135 = sphi 0, %s135
      %s137 = sphi 0, %s135
      %s138 = sphi 0, %s137
      %s152 = sphi 0, %s138
      %s156 = sphi 0, %s156
      %s158 = sphi 0, %s156
      %s159 = sphi 0, %s158
      %s173 = sphi 0, %s159
      %s177 = sphi 0, %s177
      %s179 = sphi 0, %s177
      %s180 = sphi 0, %s179
      %s194 = sphi 0, %s180
      %s200 = sphi 0, %s202
      %s203 = sphi 0, %s200
      %s204 = sphi 0, %s203
      %s220 = sphi 0, %s204
      %s226 = sphi 0, %s228
      %s229 = sphi 0, %s226
      %s230 = sphi 0, %s229
      %s246 = sphi 0, %s230
      %s252 = sphi 0, %s254
      %s255 = sphi 0, %s252
      %s256 = sphi 0, %s255
      %s272 = sphi 0, %s256
      %s278 = sphi 0, %s280
      %s281 = sphi 0, %s278
      %s282 = sphi 0, %s281
      %s298 = sphi 0, %s282
    $region4: #{tpu_custom_call.1} parent=1 // loop_header_branch
      %31 = sbr.rel (%p29) target = $region8
    $region5: #{tpu_custom_call.1} parent=1 // loop_body
      %s33 = ssub.s32 %s28, 1
      %s34 = ssub.s32 %s28, 2
      %s35 = sadd.s32 %s28, 1
      %s36 = ssub.s32 %s28, %s35
      %p37 = scmp.eq.s32.totalorder %s36, 0
      %s39 = sadd.s32 %s38, 1
      %s40 = scalar_select %p37, %s38, %s39
      %p43 = pneg %p37
      %p44 = scmp.eq.s32.totalorder %s28, 1
      %p45 = por %p43, %p44
      %p46 = scmp.ne.s32.totalorder %s38, %s41
      %p47 = scmp.eq.s32.totalorder %s28, 0
      %p48 = por %p46, %p47
      %p49 = scmp.ne.s32.totalorder %s38, %s41
      %p50 = scmp.eq.s32.totalorder %s33, 1
      %p51 = por %p49, %p50
      %p52 = scmp.ne.s32.totalorder %s41, %s42
      %p53 = scmp.eq.s32.totalorder %s33, 0
      %p54 = por %p52, %p53
      %p55 = scmp.ne.s32.totalorder %s41, %s42
      %p56 = scmp.eq.s32.totalorder %s34, 1
      %p57 = por %p55, %p56
      %p59 = scmp.ne.s32.totalorder %s42, %s58
      %p60 = scmp.eq.s32.totalorder %s34, 0
      %p61 = por %p59, %p60
      %s62 = ssub.s32 %s28, %s35
      %p63 = scmp.eq.s32.totalorder %s62, 0
      %s65 = sadd.s32 %s64, 1
      %s66 = scalar_select %p63, %s64, %s65
      %p69 = pneg %p63
      %p70 = scmp.eq.s32.totalorder %s28, 1
      %p71 = por %p69, %p70
      %p72 = scmp.ne.s32.totalorder %s64, %s67
      %p73 = scmp.eq.s32.totalorder %s28, 0
      %p74 = por %p72, %p73
      %p75 = scmp.ne.s32.totalorder %s64, %s67
      %p76 = scmp.eq.s32.totalorder %s33, 1
      %p77 = por %p75, %p76
      %p78 = scmp.ne.s32.totalorder %s67, %s68
      %p79 = scmp.eq.s32.totalorder %s33, 0
      %p80 = por %p78, %p79
      %p81 = scmp.ne.s32.totalorder %s67, %s68
      %p82 = scmp.eq.s32.totalorder %s34, 1
      %p83 = por %p81, %p82
      %p85 = scmp.ne.s32.totalorder %s68, %s84
      %p86 = scmp.eq.s32.totalorder %s34, 0
      %p87 = por %p85, %p86
      %s88 = ssub.s32 %s28, %s35
      %p89 = scmp.eq.s32.totalorder %s88, 0
      %s91 = sadd.s32 %s90, 1
      %s92 = scalar_select %p89, %s90, %s91
      %p95 = pneg %p89
      %p96 = scmp.eq.s32.totalorder %s28, 1
      %p97 = por %p95, %p96
      %p98 = scmp.ne.s32.totalorder %s90, %s93
      %p99 = scmp.eq.s32.totalorder %s28, 0
      %p100 = por %p98, %p99
      %p101 = scmp.ne.s32.totalorder %s90, %s93
      %p102 = scmp.eq.s32.totalorder %s33, 1
      %p103 = por %p101, %p102
      %p104 = scmp.ne.s32.totalorder %s93, %s94
      %p105 = scmp.eq.s32.totalorder %s33, 0
      %p106 = por %p104, %p105
      %p107 = scmp.ne.s32.totalorder %s93, %s94
      %p108 = scmp.eq.s32.totalorder %s34, 1
      %p109 = por %p107, %p108
      %p111 = scmp.ne.s32.totalorder %s94, %s110
      %p112 = scmp.eq.s32.totalorder %s34, 0
      %p113 = por %p111, %p112
      %s115 = sadd.s32 %s114, 1
      %p118 = scmp.eq.s32.totalorder %s28, 1
      %p119 = scmp.ne.s32.totalorder %s114, %s116
      %p120 = scmp.eq.s32.totalorder %s28, 0
      %p121 = por %p119, %p120
      %p122 = scmp.ne.s32.totalorder %s114, %s116
      %p123 = scmp.eq.s32.totalorder %s33, 1
      %p124 = por %p122, %p123
      %p125 = scmp.ne.s32.totalorder %s116, %s117
      %p126 = scmp.eq.s32.totalorder %s33, 0
      %p127 = por %p125, %p126
      %p128 = scmp.ne.s32.totalorder %s116, %s117
      %p129 = scmp.eq.s32.totalorder %s34, 1
      %p130 = por %p128, %p129
      %p132 = scmp.ne.s32.totalorder %s117, %s131
      %p133 = scmp.eq.s32.totalorder %s34, 0
      %p134 = por %p132, %p133
      %s136 = sadd.s32 %s135, 1
      %p139 = scmp.eq.s32.totalorder %s28, 1
      %p140 = scmp.ne.s32.totalorder %s135, %s137
      %p141 = scmp.eq.s32.totalorder %s28, 0
      %p142 = por %p140, %p141
      %p143 = scmp.ne.s32.totalorder %s135, %s137
      %p144 = scmp.eq.s32.totalorder %s33, 1
      %p145 = por %p143, %p144
      %p146 = scmp.ne.s32.totalorder %s137, %s138
      %p147 = scmp.eq.s32.totalorder %s33, 0
      %p148 = por %p146, %p147
      %p149 = scmp.ne.s32.totalorder %s137, %s138
      %p150 = scmp.eq.s32.totalorder %s34, 1
      %p151 = por %p149, %p150
      %p153 = scmp.ne.s32.totalorder %s138, %s152
      %p154 = scmp.eq.s32.totalorder %s34, 0
      %p155 = por %p153, %p154
      %s157 = sadd.s32 %s156, 1
      %p160 = scmp.eq.s32.totalorder %s28, 1
      %p161 = scmp.ne.s32.totalorder %s156, %s158
      %p162 = scmp.eq.s32.totalorder %s28, 0
      %p163 = por %p161, %p162
      %p164 = scmp.ne.s32.totalorder %s156, %s158
      %p165 = scmp.eq.s32.totalorder %s33, 1
      %p166 = por %p164, %p165
      %p167 = scmp.ne.s32.totalorder %s158, %s159
      %p168 = scmp.eq.s32.totalorder %s33, 0
      %p169 = por %p167, %p168
      %p170 = scmp.ne.s32.totalorder %s158, %s159
      %p171 = scmp.eq.s32.totalorder %s34, 1
      %p172 = por %p170, %p171
      %p174 = scmp.ne.s32.totalorder %s159, %s173
      %p175 = scmp.eq.s32.totalorder %s34, 0
      %p176 = por %p174, %p175
      %s178 = sadd.s32 %s177, 1
      %p181 = scmp.eq.s32.totalorder %s28, 1
      %p182 = scmp.ne.s32.totalorder %s177, %s179
      %p183 = scmp.eq.s32.totalorder %s28, 0
      %p184 = por %p182, %p183
      %p185 = scmp.ne.s32.totalorder %s177, %s179
      %p186 = scmp.eq.s32.totalorder %s33, 1
      %p187 = por %p185, %p186
      %p188 = scmp.ne.s32.totalorder %s179, %s180
      %p189 = scmp.eq.s32.totalorder %s33, 0
      %p190 = por %p188, %p189
      %p191 = scmp.ne.s32.totalorder %s179, %s180
      %p192 = scmp.eq.s32.totalorder %s34, 1
      %p193 = por %p191, %p192
      %p195 = scmp.ne.s32.totalorder %s180, %s194
      %p196 = scmp.eq.s32.totalorder %s34, 0
      %p197 = por %p195, %p196
      %s198 = ssub.s32 %s28, %s35
      %p199 = scmp.eq.s32.totalorder %s198, 0
      %s201 = sadd.s32 %s200, 1
      %s202 = scalar_select %p199, %s200, %s201
      %p205 = pneg %p199
      %p206 = scmp.eq.s32.totalorder %s28, 1
      %p207 = por %p205, %p206
      %p208 = scmp.ne.s32.totalorder %s200, %s203
      %p209 = scmp.eq.s32.totalorder %s28, 0
      %p210 = por %p208, %p209
      %p211 = scmp.ne.s32.totalorder %s200, %s203
      %p212 = scmp.eq.s32.totalorder %s33, 1
      %p213 = por %p211, %p212
      %p214 = scmp.ne.s32.totalorder %s203, %s204
      %p215 = scmp.eq.s32.totalorder %s33, 0
      %p216 = por %p214, %p215
      %p217 = scmp.ne.s32.totalorder %s203, %s204
      %p218 = scmp.eq.s32.totalorder %s34, 1
      %p219 = por %p217, %p218
      %p221 = scmp.ne.s32.totalorder %s204, %s220
      %p222 = scmp.eq.s32.totalorder %s34, 0
      %p223 = por %p221, %p222
      %s224 = ssub.s32 %s28, %s35
      %p225 = scmp.eq.s32.totalorder %s224, 0
      %s227 = sadd.s32 %s226, 1
      %s228 = scalar_select %p225, %s226, %s227
      %p231 = pneg %p225
      %p232 = scmp.eq.s32.totalorder %s28, 1
      %p233 = por %p231, %p232
      %p234 = scmp.ne.s32.totalorder %s226, %s229
      %p235 = scmp.eq.s32.totalorder %s28, 0
      %p236 = por %p234, %p235
      %p237 = scmp.ne.s32.totalorder %s226, %s229
      %p238 = scmp.eq.s32.totalorder %s33, 1
      %p239 = por %p237, %p238
      %p240 = scmp.ne.s32.totalorder %s229, %s230
      %p241 = scmp.eq.s32.totalorder %s33, 0
      %p242 = por %p240, %p241
      %p243 = scmp.ne.s32.totalorder %s229, %s230
      %p244 = scmp.eq.s32.totalorder %s34, 1
      %p245 = por %p243, %p244
      %p247 = scmp.ne.s32.totalorder %s230, %s246
      %p248 = scmp.eq.s32.totalorder %s34, 0
      %p249 = por %p247, %p248
      %s250 = ssub.s32 %s28, %s35
      %p251 = scmp.eq.s32.totalorder %s250, 0
      %s253 = sadd.s32 %s252, 1
      %s254 = scalar_select %p251, %s252, %s253
      %p257 = pneg %p251
      %p258 = scmp.eq.s32.totalorder %s28, 1
      %p259 = por %p257, %p258
      %p260 = scmp.ne.s32.totalorder %s252, %s255
      %p261 = scmp.eq.s32.totalorder %s28, 0
      %p262 = por %p260, %p261
      %p263 = scmp.ne.s32.totalorder %s252, %s255
      %p264 = scmp.eq.s32.totalorder %s33, 1
      %p265 = por %p263, %p264
      %p266 = scmp.ne.s32.totalorder %s255, %s256
      %p267 = scmp.eq.s32.totalorder %s33, 0
      %p268 = por %p266, %p267
      %p269 = scmp.ne.s32.totalorder %s255, %s256
      %p270 = scmp.eq.s32.totalorder %s34, 1
      %p271 = por %p269, %p270
      %p273 = scmp.ne.s32.totalorder %s256, %s272
      %p274 = scmp.eq.s32.totalorder %s34, 0
      %p275 = por %p273, %p274
      %s276 = ssub.s32 %s28, %s35
      %p277 = scmp.eq.s32.totalorder %s276, 0
      %s279 = sadd.s32 %s278, 1
      %s280 = scalar_select %p277, %s278, %s279
      %p283 = pneg %p277
      %p284 = scmp.eq.s32.totalorder %s28, 1
      %p285 = por %p283, %p284
      %p286 = scmp.ne.s32.totalorder %s278, %s281
      %p287 = scmp.eq.s32.totalorder %s28, 0
      %p288 = por %p286, %p287
      %p289 = scmp.ne.s32.totalorder %s278, %s281
      %p290 = scmp.eq.s32.totalorder %s33, 1
      %p291 = por %p289, %p290
      %p292 = scmp.ne.s32.totalorder %s281, %s282
      %p293 = scmp.eq.s32.totalorder %s33, 0
      %p294 = por %p292, %p293
      %p295 = scmp.ne.s32.totalorder %s281, %s282
      %p296 = scmp.eq.s32.totalorder %s34, 1
      %p297 = por %p295, %p296
      %p299 = scmp.ne.s32.totalorder %s282, %s298
      %p300 = scmp.eq.s32.totalorder %s34, 0
      %p301 = por %p299, %p300
      %p302 = scmp.le.s32.totalorder 1, %s28
      %p303 = scmp.lt.s32.totalorder %s28, 3
      %p304 = pnand %p302, %p303
      %p305 = pneg %p304
      // Predicated region
      $region9: #{tpu_custom_call.1} parent=5 // pred_check
        _
      $region10: #{tpu_custom_call.1} parent=5 // pred_check_branch
        %307 = sbr.rel (%p304) target = $region12
      $region11: #{tpu_custom_call.1} parent=5 // pred_region
        %s308 = ssub.s32 %s28, 1
        // Predicated region
        $region13: #{tpu_custom_call.1} parent=11 // pred_check
          %p309 = pneg %p127
        $region14: #{tpu_custom_call.1} parent=11 // pred_check_branch
          %311 = sbr.rel (%p309) target = $region16
        $region15: #{tpu_custom_call.1} parent=11 // pred_region
          _
        $region16: #{tpu_custom_call.1} parent=11 // pred_fallthru
          _
        // Predicated region
        $region17: #{tpu_custom_call.1} parent=11 // pred_check
          %p312 = pneg %p148
        $region18: #{tpu_custom_call.1} parent=11 // pred_check_branch
          %314 = sbr.rel (%p312) target = $region20
        $region19: #{tpu_custom_call.1} parent=11 // pred_region
          %316 = vsyncadd [#allocation3], 0
          %s318 = sshll.u32 %s4, 4
          %s319 = int_to_ptr.hbm [resolvable:$true] %s318
          %s320 = sshll.u32 [#allocation2], 4
          %s321 = int_to_ptr.vmem [resolvable:$true] %s320
          %323 = dma.hbm_to_vmem [thread:$0]  %s319, 128, %s321, [#allocation3]
        $region20: #{tpu_custom_call.1} parent=11 // pred_fallthru
          _
        // Predicated region
        $region21: #{tpu_custom_call.1} parent=11 // pred_check
          %p324 = pneg %p169
        $region22: #{tpu_custom_call.1} parent=11 // pred_check_branch
          %326 = sbr.rel (%p324) target = $region24
        $region23: #{tpu_custom_call.1} parent=11 // pred_region
          _
        $region24: #{tpu_custom_call.1} parent=11 // pred_fallthru
          _
        // Predicated region
        $region25: #{tpu_custom_call.1} parent=11 // pred_check
          %p327 = pneg %p190
        $region26: #{tpu_custom_call.1} parent=11 // pred_check_branch
          %329 = sbr.rel (%p327) target = $region28
        $region27: #{tpu_custom_call.1} parent=11 // pred_region
          %331 = vsyncadd [#allocation6], 0
          %s332 = sshll.u32 %s6, 4
          %s333 = int_to_ptr.hbm [resolvable:$true] %s332
          %s334 = sshll.u32 [#allocation5], 4
          %s335 = int_to_ptr.vmem [resolvable:$true] %s334
          %340 = dma.hbm_to_vmem [thread:$0]  %s333, 256, %s335, [#allocation6], 128, 128, 8
        $region28: #{tpu_custom_call.1} parent=11 // pred_fallthru
          _
      $region12: #{tpu_custom_call.1} parent=5 // pred_fallthru
        _
      %p341 = scmp.lt.s32.totalorder %s28, 2
      // Predicated region
      $region29: #{tpu_custom_call.1} parent=5 // pred_check
        %p342 = pneg %p341
      $region30: #{tpu_custom_call.1} parent=5 // pred_check_branch
        %344 = sbr.rel (%p342) target = $region32
      $region31: #{tpu_custom_call.1} parent=5 // pred_region
        // Predicated region
        $region33: #{tpu_custom_call.1} parent=31 // pred_check
          %p345 = pneg %p48
        $region34: #{tpu_custom_call.1} parent=31 // pred_check_branch
          %347 = sbr.rel (%p345) target = $region36
        $region35: #{tpu_custom_call.1} parent=31 // pred_region
          %p348 = scmp.lt.s32.totalorder %s28, 1
          %s349 = scalar_select %p348, %s28, 1
          %s350 = smul.addr %s349, 8
          %s351 = scalar_lea.vmem %s0, %s350
        $region36: #{tpu_custom_call.1} parent=31 // pred_fallthru
          _
        // Predicated region
        $region37: #{tpu_custom_call.1} parent=31 // pred_check
          %p352 = pneg %p74
        $region38: #{tpu_custom_call.1} parent=31 // pred_check_branch
          %354 = sbr.rel (%p352) target = $region40
        $region39: #{tpu_custom_call.1} parent=31 // pred_region
          %p355 = scmp.lt.s32.totalorder %s28, 1
          %s356 = scalar_select %p355, %s28, 1
          %s357 = smul.addr %s356, 8
          %s358 = scalar_lea.vmem %s1, %s357
        $region40: #{tpu_custom_call.1} parent=31 // pred_fallthru
          _
        // Predicated region
        $region41: #{tpu_custom_call.1} parent=31 // pred_check
          %p359 = pneg %p100
        $region42: #{tpu_custom_call.1} parent=31 // pred_check_branch
          %361 = sbr.rel (%p359) target = $region44
        $region43: #{tpu_custom_call.1} parent=31 // pred_region
          %p362 = scmp.lt.s32.totalorder %s28, 1
          %s363 = scalar_select %p362, %s28, 1
          %s364 = smul.addr %s363, 4
          %s365 = scalar_lea.vmem %s2, %s364
        $region44: #{tpu_custom_call.1} parent=31 // pred_fallthru
          _
      $region32: #{tpu_custom_call.1} parent=5 // pred_fallthru
        _
      %p366 = scmp.le.s32.totalorder 1, %s28
      %p367 = scmp.lt.s32.totalorder %s28, 3
      %p368 = pnand %p366, %p367
      %p369 = pneg %p368
      // Predicated region
      $region45: #{tpu_custom_call.1} parent=5 // pred_check
        _
      $region46: #{tpu_custom_call.1} parent=5 // pred_check_branch
        %371 = sbr.rel (%p368) target = $region48
      $region47: #{tpu_custom_call.1} parent=5 // pred_region
        %s372 = ssub.s32 %s28, 1
        // Predicated region
        $region49: #{tpu_custom_call.1} parent=47 // pred_check
          %p373 = pneg %p148
        $region50: #{tpu_custom_call.1} parent=47 // pred_check_branch
          %375 = sbr.rel (%p373) target = $region52
        $region51: #{tpu_custom_call.1} parent=47 // pred_region
          %377 = dma.done [#allocation3], 128
        $region52: #{tpu_custom_call.1} parent=47 // pred_fallthru
          _
        // Predicated region
        $region53: #{tpu_custom_call.1} parent=47 // pred_check
          %p378 = pneg %p190
        $region54: #{tpu_custom_call.1} parent=47 // pred_check_branch
          %380 = sbr.rel (%p378) target = $region56
        $region55: #{tpu_custom_call.1} parent=47 // pred_region
          %382 = dma.done [#allocation6], 256
        $region56: #{tpu_custom_call.1} parent=47 // pred_fallthru
          _
        %p383 = scmp.lt.s32.totalorder %s33, 1
        %s384 = scalar_select %p383, %s33, 1
        %s385 = smul.addr %s384, 8
        %s386 = scalar_lea.vmem %s0, %s385
        %p387 = pneg %p54
        %p388 = pneg %p51
        %p389 = scmp.lt.s32.totalorder %s33, 1
        %s390 = scalar_select %p389, %s33, 1
        %s391 = smul.addr %s390, 8
        %s392 = scalar_lea.vmem %s1, %s391
        %p393 = pneg %p80
        %p394 = pneg %p77
        %p395 = scmp.lt.s32.totalorder %s33, 1
        %s396 = scalar_select %p395, %s33, 1
        %s397 = smul.addr %s396, 4
        %s398 = scalar_lea.vmem %s2, %s397
        %p399 = pneg %p106
        %p400 = pneg %p103
        %p401 = pneg %p127
        %p402 = pneg %p124
        %p403 = pneg %p148
        %p404 = pneg %p145
        %p405 = pneg %p169
        %p406 = pneg %p166
        %p407 = pneg %p190
        %p408 = pneg %p187
        %p409 = pneg %p216
        %p410 = pneg %p213
        %s411 = sand.u32 %s203, 1
        %s412 = scalar_lea.sflag [#allocation4], %s411
        %s413 = sand.u32 %s203, 1
        %s414 = smul.addr %s413, 8
        %s415 = scalar_lea.vmem [#allocation7], %s414
        %p416 = pneg %p242
        %p417 = pneg %p239
        %s418 = sand.u32 %s33, 1
        %s419 = scalar_lea.sflag [#allocation9], %s418
        %s420 = sand.u32 %s229, 1
        %s421 = smul.addr %s420, 8
        %s422 = scalar_lea.vmem [#allocation8], %s421
        %p423 = pneg %p268
        %p424 = pneg %p265
        %s425 = sand.u32 %s33, 1
        %s426 = scalar_lea.sflag [#allocation9], %s425
        %s427 = sand.u32 %s255, 1
        %s428 = smul.addr %s427, 8
        %s429 = scalar_lea.vmem [#allocation10], %s428
        %p430 = pneg %p294
        %p431 = pneg %p291
        %s432 = sand.u32 %s281, 1
        %s433 = scalar_lea.sflag [#allocation12], %s432
        %s434 = sand.u32 %s281, 1
        %s435 = smul.addr %s434, 8
        %s436 = scalar_lea.vmem [#allocation11], %s435
        %p437 = scmp.lt.s32.totalorder %s33, 1
        %s438 = scalar_select %p437, %s33, 1
        %s439 = smul.addr %s438, 8
        %s440 = scalar_lea.vmem %s0, %s439
        %p441 = scmp.lt.s32.totalorder %s33, 1
        %s442 = scalar_select %p441, %s33, 1
        %s443 = smul.addr %s442, 8
        %s444 = scalar_lea.vmem %s1, %s443
        %p445 = scmp.lt.s32.totalorder %s33, 1
        %s446 = scalar_select %p445, %s33, 1
        %s447 = smul.addr %s446, 4
        %s448 = scalar_lea.vmem %s2, %s447
        %v449 = vld [vmem:[%s440] sm:$0xff]
        %v450 = vlaneseq
        %v451 = vand.u32 %v450, 127
        %452 = vset.pattern.permute.xlu0 0
        %453 = vperm.xlu0 %452, %v449
        %v454 = vpop.permute.xlu0 %453
        %vm455 = vcmp.eq.s32.totalorder %v451, %v454
        %v456 = vsel %vm455, 1, 0
        %v457 = vcvt.s32.f32 %v456
        %v458 = vld [vmem:[#allocation5] sm:$0xff]
        %v459 = vld [vmem:[#allocation5 + $0x8] sm:$0x7]
        %vm460 = vcmask 89088
        %v462 = vsel %vm460, %v457, 0
        %vm464 = vcmask 1042432
        %v466 = vsel %vm464, %v459, 0
        %468 = vmatpush.msra.mxu0 0.0
        %469 = vmatpush.msra.mxu0 0.0
        %470 = vmatpush.msra.mxu0 0.0
        %471 = vmatpush.msra.mxu0 0.0
        %472 = vmatpush.msra.mxu0 0.0
        %473 = vmatpush.msra.mxu0 0.0
        %474 = vmatpush.msra.mxu0 0.0
        %475 = vmatpush.msra.mxu0 0.0
        %476 = vmatpush.msra.mxu0 0.0
        %477 = vmatpush.msra.mxu0 0.0
        %478 = vmatpush.msra.mxu0 0.0
        %479 = vmatpush.msra.mxu0 0.0
        %480 = vmatpush.msra.mxu0 0.0
        %481 = vmatpush.msra.mxu0 0.0
        %482 = vmatpush.msra.mxu0 %v466
        %483 = vmatpush.msra.mxu0 %v458
        %484 = vmatmul.f32.gmra.mxu0 %v462
        %v485 = vpop.f32.mrf.mxu0
        %v486 = vadd.f32 0.0, %v485
        %487 = vdwg.mxu0
        %vm488 = vcmask 261120
        %489 = vst.msk [vmem:[%s415] sm:$0xff] %vm488, %v486
        %v490 = vld [vmem:[%s444] sm:$0xff]
        %v491 = vld [vmem:[%s448] sm:$0xf]
        %vm492 = vcmp.gt.f32.partialorder %v491, 0.5
        %vm493 = vcmp.eq.s32.totalorder %v449, 0
        %v494 = vlaneseq
        %v495 = vshrl.u32 %v494, 7
        %vm496 = vcmp.eq.s32.totalorder %v495, %v451
        %498 = vset.pattern.permute.xlu0 0
        %499 = vperm.xlu0 %498, %v490
        %v500 = vpop.permute.xlu0 %499
        %v502 = vperm.slane %v491, 0
        %v503 = vsub.f32 %v500, %v502
        %v504 = vsel %vm496, 1.0, %v503
        %505 = vset.pattern.permute.xlu0 1
        %506 = vperm.xlu0 %505, %v490
        %v507 = vpop.permute.xlu0 %506
        %v509 = vperm.slane %v491, 1
        %v510 = vsub.f32 %v507, %v509
        %v511 = vsel %vm496, 1.0, %v510
        %512 = vset.pattern.permute.xlu0 2
        %513 = vperm.xlu0 %512, %v490
        %v514 = vpop.permute.xlu0 %513
        %v516 = vperm.slane %v491, 2
        %v517 = vsub.f32 %v514, %v516
        %v518 = vsel %vm496, 1.0, %v517
        %v519 = vmul.f32 %v504, %v504
        %v520 = vmul.f32 %v511, %v511
        %v521 = vadd.f32 %v519, %v520
        %v522 = vmul.f32 %v518, %v518
        %v523 = vadd.f32 %v521, %v522
        %v524 = vrsqrt.pop %v523
        %v525 = vmul.f32 %v524, %v523
        %v526 = vmul.f32 %v525, %v524
        %v527 = vmul.f32 0.5, %v526
        %v528 = vsub.f32 1.5, %v527
        %v529 = vmul.f32 %v524, %v528
        %v530 = vmul.f32 %v523, %v529
        %vm531 = vcmp.eq.f32.partialorder %v523, inf
        %v532 = vsel %vm531, %v523, %v530
        %vm533 = vcmp.eq.f32.partialorder %v523, 0.0
        %v534 = vand.u32 %v523, 2147483648
        %v535 = vsel %vm533, %v534, %v532
        %v536 = vadd.f32 %v535, 1e-06
        %v537 = vrcp.pop %v536
        %v538 = vmul.f32 %v536, %v537
        %v539 = vsub.f32 1.0, %v538
        %v540 = vmul.f32 %v537, %v539
        %v541 = vadd.f32 %v537, %v540
        %vm542 = vweird.f32 %v536
        %vm543 = vweird.f32 %v537
        %vm544 = vmor %vm542, %vm543
        %v545 = vsel %vm544, %v537, %v541
        %v546 = vand.u32 2147483647, %v536
        %vm547 = vcmp.eq.f32.partialorder %v546, 8.507059e+37
        %v548 = vand.u32 %v536, 2147483648
        %v549 = vor.u32 1.1754944e-38, %v548
        %v550 = vsel %vm547, %v549, %v545
        %v551 = vmul.f32 %v504, %v550
        %v552 = vsel %vm496, 0.0, %v551
        %v553 = vmul.f32 %v511, %v550
        %v554 = vsel %vm496, 0.0, %v553
        %v555 = vmul.f32 %v518, %v550
        %v556 = vsel %vm496, 0.0, %v555
        %v557 = vsel %vm496, 0.0, %v535
        %vm558 = vcmp.lt.f32.partialorder %v557, 5.0
        %v559 = vsel %vm493, 1, 0
        %560 = vset.pattern.permute.xlu0 0
        %561 = vperm.xlu0 %560, %v559
        %v562 = vpop.permute.xlu0 %561
        %vm563 = vcmp.eq.s32.totalorder %v562, 1
        %v564 = vsel %vm492, 1, 0
        %v565 = vperm.slane %v564, 3
        %vm566 = vcmp.eq.s32.totalorder %v565, 1
        %vm567 = vmor %vm563, %vm566
        %vm568 = vmxor %vm567, 1
        %vm569 = vmand %vm558, %vm568
        %v570 = vmul.f32 %v557, 0.62831855
        %v571 = vand.u32 2147483647, %v570
        %vm572 = vcmp.le.f32.partialorder %v571, 0.7853982
        %vm573 = vcmp.lt.s32.totalorder %v570, 0
        %v574 = vand.u32 %v570, 2139095040
        %v575 = vshrl.u32 %v574, 23
        %v576 = vsub.s32 %v575, 127
        %v577 = vand.u32 2147483647, %v570
        %v578 = vand.u32 %v577, 8388607
        %v579 = vor.u32 %v578, 8388608
        %v580 = vsub.s32 0, %v579
        %v581 = vadd.s32 %v576, 1
        %vm582 = vcmp.gt.s32.totalorder %v581, 0
        %v583 = vsel %vm582, %v581, 0
        %v584 = vshrl.u32 %v583, 5
        %v585 = vand.u32 %v583, 31
        %v586 = vsub.s32 32, %v585
        %v587 = vshrl.u32 683565275, %v586
        %v588 = vshll.u32 683565275, %v585
        %v589 = vshrl.u32 2475754826, %v586
        %v590 = vor.u32 %v588, %v589
        %v591 = vshll.u32 2475754826, %v585
        %v592 = vshrl.u32 2131351028, %v586
        %v593 = vor.u32 %v591, %v592
        %v594 = vshll.u32 2131351028, %v585
        %v595 = vshrl.u32 2102212464, %v586
        %v596 = vor.u32 %v594, %v595
        %v597 = vshll.u32 2102212464, %v585
        %v598 = vshrl.u32 920167782, %v586
        %v599 = vor.u32 %v597, %v598
        %v600 = vshll.u32 920167782, %v585
        %v601 = vshrl.u32 1326507024, %v586
        %v602 = vor.u32 %v600, %v601
        %vm603 = vcmp.lt.s32.totalorder %v584, 1
        %vm604 = vcmp.lt.s32.totalorder %v584, 2
        %vm605 = vcmp.lt.s32.totalorder %v584, 3
        %vm606 = vcmp.lt.s32.totalorder %v584, 4
        %v607 = vsel %vm603, %v587, %v590
        %v608 = vsel %vm606, %v596, 2102212464
        %v609 = vsel %vm605, %v593, %v608
        %v610 = vsel %vm604, %v607, %v609
        %v611 = vsel %vm603, %v590, %v593
        %v612 = vsel %vm606, %v599, 920167782
        %v613 = vsel %vm605, %v596, %v612
        %v614 = vsel %vm604, %v611, %v613
        %v615 = vsel %vm603, %v593, %v596
        %v616 = vsel %vm606, %v602, 1326507024
        %v617 = vsel %vm605, %v599, %v616
        %v618 = vsel %vm604, %v615, %v617
        %v619 = vshll.u32 %v579, 8
        %v620 = vand.u32 %v619, 65535
        %v621 = vshrl.u32 %v619, 16
        %v622 = vand.u32 %v618, 65535
        %v623 = vshrl.u32 %v618, 16
        %v624 = vmul.u32 %v620, %v622
        %v625 = vmul.u32 %v620, %v623
        %v626 = vmul.u32 %v621, %v622
        %v627 = vmul.u32 %v621, %v623
        %v628 = vshll.u32 %v625, 16
        %v629 = vshrl.u32 %v625, 16
        %v630 = vshll.u32 %v626, 16
        %v631 = vshrl.u32 %v626, 16
        %vm632 = vc.u32 %v624, %v628
        %v633 = vsel %vm632, 1, 0
        %v634 = vadd.s32 %v624, %v628
        %v635 = vadd.s32 %v627, %v633
        %vm636 = vc.u32 %v634, %v630
        %v637 = vsel %vm636, 1, 0
        %v638 = vadd.s32 %v634, %v630
        %v639 = vadd.s32 %v635, %v637
        %v640 = vadd.s32 %v639, %v629
        %v641 = vadd.s32 %v640, %v631
        %v642 = vand.u32 %v619, 65535
        %v643 = vshrl.u32 %v619, 16
        %v644 = vand.u32 %v614, 65535
        %v645 = vshrl.u32 %v614, 16
        %v646 = vmul.u32 %v642, %v644
        %v647 = vmul.u32 %v642, %v645
        %v648 = vmul.u32 %v643, %v644
        %v649 = vmul.u32 %v643, %v645
        %v650 = vshll.u32 %v647, 16
        %v651 = vshrl.u32 %v647, 16
        %v652 = vshll.u32 %v648, 16
        %v653 = vshrl.u32 %v648, 16
        %vm654 = vc.u32 %v646, %v650
        %v655 = vsel %vm654, 1, 0
        %v656 = vadd.s32 %v646, %v650
        %v657 = vadd.s32 %v649, %v655
        %vm658 = vc.u32 %v656, %v652
        %v659 = vsel %vm658, 1, 0
        %v660 = vadd.s32 %v656, %v652
        %v661 = vadd.s32 %v657, %v659
        %v662 = vadd.s32 %v661, %v651
        %v663 = vadd.s32 %v662, %v653
        %v664 = vmul.u32 %v619, %v610
        %v665 = vadd.s32 %v641, %v660
        %vm666 = vc.u32 %v641, %v660
        %v667 = vadd.s32 %v663, 1
        %v668 = vsel %vm666, %v667, %v663
        %v669 = vadd.s32 %v664, %v668
        %v670 = vadd.s32 %v669, 536870912
        %v671 = vshrl.u32 %v670, 30
        %v672 = vshll.u32 %v671, 30
        %v673 = vsub.s32 %v669, %v672
        %vm674 = vcmp.lt.s32.totalorder %v673, 0
        %v675 = vsub.s32 0, %v673
        %v676 = vsel %vm674, %v675, %v673
        %v677 = vclz %v676
        %v678 = vsub.s32 %v677, 2
        %vm679 = vcmp.gt.s32.totalorder 0, %v678
        %v680 = vsel %vm679, 0, %v678
        %v681 = vsub.s32 32, %v680
        %v682 = vshll.u32 %v673, %v680
        %v683 = vshrl.u32 %v665, %v681
        %v684 = vor.u32 %v682, %v683
        %v685 = vsub.s32 4294967266, %v680
        %v686 = vadd.s32 %v685, 127
        %v687 = vshll.u32 %v686, 23
        %v688 = vor.u32 4788187, %v687
        %v689 = vand.u32 2147483647, %v688
        %v691 = vcvt.s32.f32 %v684
        %v692 = vmul.f32 %v691, %v689
        %v693 = vxor.u32 %v692, 2147483648
        %v694 = vsel %vm573, %v693, %v692
        %v695 = vsub.s32 4, %v671
        %v696 = vsel %vm573, %v695, %v671
        %v697 = vsel %vm572, %v570, %v694
        %v698 = vsel %vm572, 0, %v696
        %v699 = vmul.f32 %v697, %v697
        %v700 = vmul.f32 %v699, -0.001358992
        %v701 = vadd.f32 %v700, 0.041655596
        %v702 = vmul.f32 %v699, %v701
        %v703 = vadd.f32 %v702, -0.4999988
        %v704 = vmul.f32 %v699, %v703
        %v705 = vadd.f32 1.0, %v704
        %v706 = vmul.f32 %v697, %v697
        %v707 = vmul.f32 %v706, -0.00019511016
        %v708 = vadd.f32 %v707, 0.008332121
        %v709 = vmul.f32 %v706, %v708
        %v710 = vadd.f32 %v709, -0.16666654
        %v711 = vmul.f32 %v706, %v710
        %v712 = vadd.f32 %v711, 1.0
        %v713 = vmul.f32 %v712, %v697
        %vm714 = vweird.f32 %v570
        %v715 = vand.u32 %v698, 3
        %vm716 = vcmp.lt.s32.totalorder %v715, 2
        %vm717 = vcmp.eq.s32.totalorder %v715, 0
        %v718 = vxor.u32 %v713, 2147483648
        %v719 = vsel %vm717, %v705, %v718
        %vm720 = vcmp.eq.s32.totalorder %v715, 2
        %v721 = vxor.u32 %v705, 2147483648
        %v722 = vsel %vm720, %v721, %v713
        %v723 = vsel %vm716, %v719, %v722
        %v724 = vsel %vm714, nan, %v723
        %v725 = vadd.f32 %v724, 1.0
        %v726 = vmul.f32 %v725, 0.5
        %v727 = vsel %vm569, %v726, 0.0
        %vm728 = vcmask 64512
        %729 = vst.msk [vmem:[%s422] sm:$0xff] %vm728, %v727
        %v730 = vld [vmem:[#allocation2] sm:$0xff]
        %v732 = vsel %vm728, %v557, 0
        %734 = vmatpush.msra.mxu0 0.0
        %735 = vmatpush.msra.mxu0 0.0
        %736 = vmatpush.msra.mxu0 0.0
        %737 = vmatpush.msra.mxu0 0.0
        %738 = vmatpush.msra.mxu0 0.0
        %739 = vmatpush.msra.mxu0 0.0
        %740 = vmatpush.msra.mxu0 0.0
        %741 = vmatpush.msra.mxu0 0.0
        %742 = vmatpush.msra.mxu0 0.0
        %743 = vmatpush.msra.mxu0 0.0
        %744 = vmatpush.msra.mxu0 0.0
        %745 = vmatpush.msra.mxu0 0.0
        %746 = vmatpush.msra.mxu0 0.0
        %747 = vmatpush.msra.mxu0 0.0
        %748 = vmatpush.msra.mxu0 0.0
        %749 = vmatpush.msra.mxu0 %v730
        %750 = vmatmul.f32.gmra.mxu0 %v732
        %v751 = vpop.f32.mrf.mxu0
        %v752 = vadd.f32 0.0, %v751
        %753 = vdwg.mxu0
        %v754 = vld [vmem:[%s3] sm:$0x1]
        %v756 = vperm.slane %v754, 0
        %v758 = vsub.f32 %v752, %v756
        %v759 = vmul.f32 %v758, -4.5
        %v760 = vmul.f32 %v759, %v758
        %v761 = vmul.f32 %v760, 1.442695
        %v762 = vpow.pop %v761
        %v764 = vsel %vm728, %v727, 0
        %766 = vmatpush.msra.mxu0 0.0
        %767 = vmatpush.msra.mxu0 0.0
        %768 = vmatpush.msra.mxu0 0.0
        %769 = vmatpush.msra.mxu0 0.0
        %770 = vmatpush.msra.mxu0 0.0
        %771 = vmatpush.msra.mxu0 0.0
        %772 = vmatpush.msra.mxu0 0.0
        %773 = vmatpush.msra.mxu0 0.0
        %774 = vmatpush.msra.mxu0 0.0
        %775 = vmatpush.msra.mxu0 0.0
        %776 = vmatpush.msra.mxu0 0.0
        %777 = vmatpush.msra.mxu0 0.0
        %778 = vmatpush.msra.mxu0 0.0
        %779 = vmatpush.msra.mxu0 0.0
        %780 = vmatpush.msra.mxu0 0.0
        %781 = vmatpush.msra.mxu0 %v730
        %782 = vmatmul.f32.gmra.mxu0 %v764
        %v783 = vpop.f32.mrf.mxu0
        %v784 = vadd.f32 0.0, %v783
        %785 = vdwg.mxu0
        %v786 = vmul.f32 %v762, %v784
        %787 = vst [vmem:[%s436] sm:$0xff] %v786
        %v788 = vld [vmem:[%s5] sm:$0xff]
        %s789 = scalar_lea.vmem %s5, 8
        %v790 = vld [vmem:[%s789] sm:$0xff]
        %v792 = vsel %vm728, %v554, 0
        %794 = vmatpush.msra.mxu0 0.0
        %795 = vmatpush.msra.mxu0 0.0
        %796 = vmatpush.msra.mxu0 0.0
        %797 = vmatpush.msra.mxu0 0.0
        %798 = vmatpush.msra.mxu0 0.0
        %799 = vmatpush.msra.mxu0 0.0
        %800 = vmatpush.msra.mxu0 0.0
        %801 = vmatpush.msra.mxu0 0.0
        %802 = vmatpush.msra.mxu0 0.0
        %803 = vmatpush.msra.mxu0 0.0
        %804 = vmatpush.msra.mxu0 0.0
        %805 = vmatpush.msra.mxu0 0.0
        %806 = vmatpush.msra.mxu0 0.0
        %807 = vmatpush.msra.mxu0 0.0
        %808 = vmatpush.msra.mxu0 0.0
        %809 = vmatpush.msra.mxu0 %v790
        %810 = vmatmul.f32.gmra.mxu0 %v792
        %v811 = vpop.f32.mrf.mxu0
        %v812 = vadd.f32 0.0, %v811
        %813 = vdwg.mxu0
        %v815 = vsel %vm728, %v552, 0
        %817 = vmatpush.msra.mxu0 0.0
        %818 = vmatpush.msra.mxu0 0.0
        %819 = vmatpush.msra.mxu0 0.0
        %820 = vmatpush.msra.mxu0 0.0
        %821 = vmatpush.msra.mxu0 0.0
        %822 = vmatpush.msra.mxu0 0.0
        %823 = vmatpush.msra.mxu0 0.0
        %824 = vmatpush.msra.mxu0 0.0
        %825 = vmatpush.msra.mxu0 0.0
        %826 = vmatpush.msra.mxu0 0.0
        %827 = vmatpush.msra.mxu0 0.0
        %828 = vmatpush.msra.mxu0 0.0
        %829 = vmatpush.msra.mxu0 0.0
        %830 = vmatpush.msra.mxu0 0.0
        %831 = vmatpush.msra.mxu0 0.0
        %832 = vmatpush.msra.mxu0 %v788
        %833 = vmatmul.f32.gmra.mxu0 %v815
        %v834 = vpop.f32.mrf.mxu0
        %v835 = vadd.f32 %v812, %v834
        %836 = vdwg.mxu0
        %s837 = scalar_lea.vmem %s5, 16
        %v838 = vld [vmem:[%s837] sm:$0xff]
        %v840 = vsel %vm728, %v556, 0
        %842 = vmatpush.msra.mxu0 0.0
        %843 = vmatpush.msra.mxu0 0.0
        %844 = vmatpush.msra.mxu0 0.0
        %845 = vmatpush.msra.mxu0 0.0
        %846 = vmatpush.msra.mxu0 0.0
        %847 = vmatpush.msra.mxu0 0.0
        %848 = vmatpush.msra.mxu0 0.0
        %849 = vmatpush.msra.mxu0 0.0
        %850 = vmatpush.msra.mxu0 0.0
        %851 = vmatpush.msra.mxu0 0.0
        %852 = vmatpush.msra.mxu0 0.0
        %853 = vmatpush.msra.mxu0 0.0
        %854 = vmatpush.msra.mxu0 0.0
        %855 = vmatpush.msra.mxu0 0.0
        %856 = vmatpush.msra.mxu0 0.0
        %857 = vmatpush.msra.mxu0 %v838
        %858 = vmatmul.f32.gmra.mxu0 %v840
        %v859 = vpop.f32.mrf.mxu0
        %v860 = vadd.f32 0.0, %v859
        %861 = vdwg.mxu0
        %v862 = vadd.f32 %v835, %v860
        %vm863 = vcmask 195584
        %864 = vst.msk [vmem:[%s429] sm:$0xff] %vm863, %v862
        %s865 = sand.u32 %s203, 1
        %s866 = scalar_lea.sflag [#allocation4], %s865
        %s867 = sand.u32 %s203, 1
        %s868 = smul.addr %s867, 8
        %s869 = scalar_lea.vmem [#allocation7], %s868
        %s870 = sand.u32 %s33, 1
        %s871 = scalar_lea.sflag [#allocation9], %s870
        %s872 = sand.u32 %s229, 1
        %s873 = smul.addr %s872, 8
        %s874 = scalar_lea.vmem [#allocation8], %s873
        %s875 = sand.u32 %s33, 1
        %s876 = scalar_lea.sflag [#allocation9], %s875
        %s877 = sand.u32 %s255, 1
        %s878 = smul.addr %s877, 8
        %s879 = scalar_lea.vmem [#allocation10], %s878
        %s880 = sand.u32 %s281, 1
        %s881 = scalar_lea.sflag [#allocation12], %s880
        %s882 = sand.u32 %s281, 1
        %s883 = smul.addr %s882, 8
        %s884 = scalar_lea.vmem [#allocation11], %s883
        // Predicated region
        $region57: #{tpu_custom_call.1} parent=47 // pred_check
          %p885 = pneg %p213
        $region58: #{tpu_custom_call.1} parent=47 // pred_check_branch
          %887 = sbr.rel (%p885) target = $region60
        $region59: #{tpu_custom_call.1} parent=47 // pred_region
          %889 = vsyncadd %s866, 0
          %s890 = smul.addr %s33, 8
          %s891 = scalar_lea.hbm %s7, %s890
          %s893 = sshll.u32 %s869, 4
          %s894 = int_to_ptr.vmem [resolvable:$true] %s893
          %s895 = sshll.u32 %s891, 4
          %s896 = int_to_ptr.hbm [resolvable:$true] %s895
          %898 = dma.vmem_to_hbm [thread:$0]  %s894, 128, %s896, %s866
        $region60: #{tpu_custom_call.1} parent=47 // pred_fallthru
          _
        // Predicated region
        $region61: #{tpu_custom_call.1} parent=47 // pred_check
          %p899 = pneg %p239
        $region62: #{tpu_custom_call.1} parent=47 // pred_check_branch
          %901 = sbr.rel (%p899) target = $region64
        $region63: #{tpu_custom_call.1} parent=47 // pred_region
          %903 = vsyncadd %s871, 0
          %s904 = smul.addr %s33, 8
          %s905 = scalar_lea.hbm %s8, %s904
          %s907 = sshll.u32 %s874, 4
          %s908 = int_to_ptr.vmem [resolvable:$true] %s907
          %s909 = sshll.u32 %s905, 4
          %s910 = int_to_ptr.hbm [resolvable:$true] %s909
          %912 = dma.vmem_to_hbm [thread:$0]  %s908, 128, %s910, %s871
        $region64: #{tpu_custom_call.1} parent=47 // pred_fallthru
          _
        // Predicated region
        $region65: #{tpu_custom_call.1} parent=47 // pred_check
          %p913 = pneg %p265
        $region66: #{tpu_custom_call.1} parent=47 // pred_check_branch
          %915 = sbr.rel (%p913) target = $region68
        $region67: #{tpu_custom_call.1} parent=47 // pred_region
          %917 = vsyncadd %s876, 0
          %s918 = smul.addr %s33, 8
          %s919 = scalar_lea.hbm %s9, %s918
          %s921 = sshll.u32 %s879, 4
          %s922 = int_to_ptr.vmem [resolvable:$true] %s921
          %s923 = sshll.u32 %s919, 4
          %s924 = int_to_ptr.hbm [resolvable:$true] %s923
          %926 = dma.vmem_to_hbm [thread:$0]  %s922, 128, %s924, %s876
        $region68: #{tpu_custom_call.1} parent=47 // pred_fallthru
          _
        // Predicated region
        $region69: #{tpu_custom_call.1} parent=47 // pred_check
          %p927 = pneg %p291
        $region70: #{tpu_custom_call.1} parent=47 // pred_check_branch
          %929 = sbr.rel (%p927) target = $region72
        $region71: #{tpu_custom_call.1} parent=47 // pred_region
          %931 = vsyncadd %s881, 0
          %s932 = smul.addr %s33, 8
          %s933 = scalar_lea.hbm %s10, %s932
          %s935 = sshll.u32 %s884, 4
          %s936 = int_to_ptr.vmem [resolvable:$true] %s935
          %s937 = sshll.u32 %s933, 4
          %s938 = int_to_ptr.hbm [resolvable:$true] %s937
          %940 = dma.vmem_to_hbm [thread:$0]  %s936, 128, %s938, %s881
        $region72: #{tpu_custom_call.1} parent=47 // pred_fallthru
          _
      $region48: #{tpu_custom_call.1} parent=5 // pred_fallthru
        _
      %p941 = scmp.le.s32.totalorder 2, %s28
      // Predicated region
      $region73: #{tpu_custom_call.1} parent=5 // pred_check
        %p942 = pneg %p941
      $region74: #{tpu_custom_call.1} parent=5 // pred_check_branch
        %944 = sbr.rel (%p942) target = $region76
      $region75: #{tpu_custom_call.1} parent=5 // pred_region
        %s945 = ssub.s32 %s28, 2
        // Predicated region
        $region77: #{tpu_custom_call.1} parent=75 // pred_check
          %p946 = pneg %p219
        $region78: #{tpu_custom_call.1} parent=75 // pred_check_branch
          %948 = sbr.rel (%p946) target = $region80
        $region79: #{tpu_custom_call.1} parent=75 // pred_region
          %s949 = sand.u32 %s204, 1
          %s950 = scalar_lea.sflag [#allocation4], %s949
          %s951 = sand.u32 %s204, 1
          %s952 = smul.addr %s951, 8
          %s953 = scalar_lea.vmem [#allocation7], %s952
          %955 = dma.done %s950, 128
        $region80: #{tpu_custom_call.1} parent=75 // pred_fallthru
          _
        // Predicated region
        $region81: #{tpu_custom_call.1} parent=75 // pred_check
          %p956 = pneg %p245
        $region82: #{tpu_custom_call.1} parent=75 // pred_check_branch
          %958 = sbr.rel (%p956) target = $region84
        $region83: #{tpu_custom_call.1} parent=75 // pred_region
          %s959 = sand.u32 %s34, 1
          %s960 = scalar_lea.sflag [#allocation9], %s959
          %s961 = sand.u32 %s230, 1
          %s962 = smul.addr %s961, 8
          %s963 = scalar_lea.vmem [#allocation8], %s962
          %965 = dma.done %s960, 128
        $region84: #{tpu_custom_call.1} parent=75 // pred_fallthru
          _
        // Predicated region
        $region85: #{tpu_custom_call.1} parent=75 // pred_check
          %p966 = pneg %p271
        $region86: #{tpu_custom_call.1} parent=75 // pred_check_branch
          %968 = sbr.rel (%p966) target = $region88
        $region87: #{tpu_custom_call.1} parent=75 // pred_region
          %s969 = sand.u32 %s34, 1
          %s970 = scalar_lea.sflag [#allocation9], %s969
          %s971 = sand.u32 %s256, 1
          %s972 = smul.addr %s971, 8
          %s973 = scalar_lea.vmem [#allocation10], %s972
          %975 = dma.done %s970, 128
        $region88: #{tpu_custom_call.1} parent=75 // pred_fallthru
          _
        // Predicated region
        $region89: #{tpu_custom_call.1} parent=75 // pred_check
          %p976 = pneg %p297
        $region90: #{tpu_custom_call.1} parent=75 // pred_check_branch
          %978 = sbr.rel (%p976) target = $region92
        $region91: #{tpu_custom_call.1} parent=75 // pred_region
          %s979 = sand.u32 %s282, 1
          %s980 = scalar_lea.sflag [#allocation12], %s979
          %s981 = sand.u32 %s282, 1
          %s982 = smul.addr %s981, 8
          %s983 = scalar_lea.vmem [#allocation11], %s982
          %985 = dma.done %s980, 128
        $region92: #{tpu_custom_call.1} parent=75 // pred_fallthru
          _
      $region76: #{tpu_custom_call.1} parent=5 // pred_fallthru
        _
    $region6: #{tpu_custom_call.1} parent=1 // loop_footer
      %s32 = sadd.s32 1, %s28
    $region7: #{tpu_custom_call.1} parent=1 // loop_footer_branch
      %27 = sbr.rel target = $region3
    $region8: #{tpu_custom_call.1} parent=1 // loop_exit
      _
    %986 = vsyncpa [#allocation3], 1
    %s987 = scalar_lea.sflag [#allocation3], 1
    %988 = vsyncpa %s987, 1
    %989 = vsyncpa [#allocation6], 1
    %990 = vsyncpa [#allocation4], 1
    %s991 = scalar_lea.sflag [#allocation4], 1
    %992 = vsyncpa %s991, 1
    %993 = vsyncpa [#allocation9], 1
    %s994 = scalar_lea.sflag [#allocation9], 1
    %995 = vsyncpa %s994, 1
    %996 = vsyncpa [#allocation12], 1
    %s997 = scalar_lea.sflag [#allocation12], 1
    %998 = vsyncpa %s997, 1

</llo_original>
